<compile_context>
chip_gen: v5e
topology: v5e:2x2
jax: 0.10.0
libtpu: 0.0.40
codegen_flags: <defaults>
</compile_context>

<pallas_src>
import jax
import jax.numpy as jnp
from jax.experimental import pallas as pl
from jax.experimental.pallas import tpu as pltpu


def hazard_kernel(x_ref, w1_ref, b1_ref, w2_ref, b2_ref, out_ref):
    # x_ref  : (TILE_B, D)    input dtype (f32/bf16), native layout, pipelined
    # w1_ref : (H, D)         bf16  -- resident (constant index_map)
    # b1_ref : (H, 1)         f32   -- resident
    # w2_ref : (1, H)         f32   -- BN-folded output weights, resident
    # b2_ref : (1, 1)         f32   -- BN-folded output bias, SMEM scalar
    # out_ref: (1, 1, TILE_B) f32   -- lane-dense output row
    x_bf = x_ref[...].astype(jnp.bfloat16)
    # h = W1^T @ x^T : contract over D on both operands -> (H, TILE_B), batch in lanes.
    h = jax.lax.dot_general(
        w1_ref[...], x_bf,
        dimension_numbers=(((1,), (1,)), ((), ())),
        preferred_element_type=jnp.float32)
    h = jnp.maximum(h + b1_ref[...], 0.0)            # bias + ReLU (VPU)
    # Dropout(p=0.5) is identity in eval mode; BatchNorm is folded into w2/b2.
    # H -> 1 projection on the MXU (idle after the first matmul).
    y = jnp.dot(w2_ref[...], h, preferred_element_type=jnp.float32)   # (1, TILE_B)
    y = jnp.clip(y + b2_ref[0, 0], -75.0, 75.0)
    out_ref[...] = y[None].astype(out_ref.dtype)


def _round_up(x, m):
    return (x + m - 1) // m * m


def hazard_regression(x, params, *, eps=1e-5, tile_b=8192, vmem_limit_bytes=None):
    """Fused eval-mode forward pass, gridded and pipelined over batch."""
    batch, d = x.shape
    h_dim = params["w1"].shape[1]
    out_dim = params["w2"].shape[1]
    assert out_dim == 1  # TODO(synk): generalize the final projection for output_size > 1

    # ---- fold eval-mode BatchNorm into the output projection (tiny, plain JAX) ----
    scale = params["gamma"] * jax.lax.rsqrt(params["var"] + eps)               # (1, H)
    w2_eff_t = (scale.reshape(h_dim, 1) * params["w2"]).T.astype(jnp.float32)  # (1, H)
    b2_eff = ((params["beta"] - params["mean"] * scale)
              @ params["w2"]).astype(jnp.float32)                              # (1, 1)

    w1_t = params["w1"].T.astype(jnp.bfloat16)                   # (H, D), resident
    b1_col = params["b1"].reshape(h_dim, 1).astype(jnp.float32)  # (H, 1), resident

    # ---- batch tile selection ----
    x_bytes = x.dtype.itemsize
    b_lane = _round_up(batch, 128)                                # batch, lane-aligned
    tile_b = max(128, _round_up(min(tile_b, b_lane), 128))

    # Cap the tile so the per-step VMEM footprint (double-buffered x tile +
    # (H, tile_b) f32 intermediate + double-buffered output row) stays well
    # inside even v7x's 64 MiB.  For extremely wide D this shrinks tile_b; a
    # D-chunked accumulator grid axis would be the next step beyond that.
    per_elem = 2 * d * x_bytes + h_dim * 4 + 2 * 4
    tile_b = min(tile_b, max(128, (40 << 20) // per_elem // 128 * 128))

    # v7x has two TensorCores: if the batch spans more than one 128-lane tile
    # but would otherwise be a single grid step, split it so the "parallel"
    # grid axis feeds both cores (no-op on v5e / v6e).
    if b_lane > 128 and pl.cdiv(b_lane, tile_b) < 2:
        tile_b = max(128, _round_up(pl.cdiv(b_lane, 2), 128))

    num_tiles = pl.cdiv(batch, tile_b)
    b_pad = num_tiles * tile_b

    # Native (B, D) layout: no transpose / cast pass.  Only a ragged tail batch
    # needs a pad-only copy; tile-multiple batches are streamed untouched.
    x_in = x if b_pad == batch else jnp.pad(x, ((0, b_pad - batch), (0, 0)))

    # Explicit scoped-VMEM limit when the footprint exceeds v5e's 16 MiB default.
    if vmem_limit_bytes is None:
        need = (2 * tile_b * d * x_bytes          # double-buffered x tile
                + 2 * tile_b * 4                  # double-buffered output row
                + h_dim * tile_b * 4              # (H, TILE_B) intermediate
                + h_dim * (2 * d + 8) + 1024)     # resident weights
        if need > (12 << 20):
            vmem_limit_bytes = int(min(need + (8 << 20), 56 << 20))

    out = pl.pallas_call(
        hazard_kernel,
        out_shape=jax.ShapeDtypeStruct((num_tiles, 1, tile_b), jnp.float32),
        grid=(num_tiles,),
        in_specs=[
            pl.BlockSpec((tile_b, d), lambda i: (i, 0)),        # x tile (pipelined)
            pl.BlockSpec((h_dim, d), lambda i: (0, 0)),          # W1^T, resident
            pl.BlockSpec((h_dim, 1), lambda i: (0, 0)),          # b1, resident
            pl.BlockSpec((1, h_dim), lambda i: (0, 0)),          # BN-folded w2^T, resident
            pl.BlockSpec(memory_space=pltpu.MemorySpace.SMEM),   # BN-folded scalar bias
        ],
        out_specs=pl.BlockSpec((1, 1, tile_b), lambda i: (i, 0, 0)),
        compiler_params=pltpu.CompilerParams(
            dimension_semantics=("parallel",),    # v7x: shard batch tiles over both TCs
            vmem_limit_bytes=vmem_limit_bytes),
    )(x_in, w1_t, b1_col, w2_eff_t, b2_eff)

    # Contiguous readback: (num_tiles, 1, tile_b) -> (b_pad,) -> (batch, 1).
    return out.reshape(b_pad)[:batch].reshape(batch, out_dim)


def init_params(key, input_dimension, hidden_layer_size=32, output_size=1):
    """Deterministic synthetic parameters matching the module's shapes
    (hidden_layers=1, with_bias=False, with_batchnorm=True)."""
    next_size = hidden_layer_size // 1  # layer 0: hidden_layer_size // (1 + 0)
    k1, k2, k3, k4, k5 = jax.random.split(key, 5)
    bound1 = 1.0 / jnp.sqrt(input_dimension)
    bound2 = 1.0 / jnp.sqrt(next_size)
    return {
        # Linear(input_dimension, next_size), stored [in, out]
        "w1": jax.random.uniform(k1, (input_dimension, next_size), jnp.float32,
                                 -bound1, bound1),
        "b1": jax.random.uniform(k2, (1, next_size), jnp.float32, -bound1, bound1),
        # BatchNorm1d(next_size): affine params + running stats (eval mode)
        "gamma": 1.0 + 0.1 * jax.random.normal(k3, (1, next_size), jnp.float32),
        "beta": 0.1 * jax.random.normal(k4, (1, next_size), jnp.float32),
        "mean": jnp.zeros((1, next_size), jnp.float32),
        "var": jnp.ones((1, next_size), jnp.float32),
        # Linear(next_size, output_size, bias=False), stored [in, out]
        "w2": jax.random.uniform(k5, (next_size, output_size), jnp.float32,
                                 -bound2, bound2),
    }


def reference_forward(x, params, eps=1e-5, compute_dtype=jnp.bfloat16):
    """Pure-JAX reference (unfused module math, same bf16 input casting)."""
    h = jnp.dot(x.astype(compute_dtype), params["w1"].astype(compute_dtype),
                preferred_element_type=jnp.float32) + params["b1"]
    h = jnp.maximum(h, 0.0)
    h = (h - params["mean"]) * jax.lax.rsqrt(params["var"] + eps) * params["gamma"] \
        + params["beta"]
    y = h @ params["w2"]
    return jnp.clip(y, -75.0, 75.0)


if __name__ == "__main__":
    key = jax.random.PRNGKey(0)
    k_x, k_x2, k_p = jax.random.split(key, 3)

    input_dimension = 16
    params = init_params(k_p, input_dimension)

    # Small single-tile case (batch=4 -> one 128-lane tile).
    x = jax.random.normal(k_x, (4, input_dimension), jnp.float32)
    out = jax.block_until_ready(hazard_regression(x, params))
    ref = reference_forward(x, params)
    assert out.shape == (4, 1)
    assert jnp.allclose(out, ref, atol=1e-3, rtol=1e-3)

    # Multi-tile case with a ragged tail: 300 rows -> 2 tiles of 256 by default
    # (the >=2-tile split for v7x kicks in), padded tail rows sliced off.
    x2 = jax.random.normal(k_x2, (300, input_dimension), jnp.float32)
    out2 = jax.block_until_ready(hazard_regression(x2, params))
    ref2 = reference_forward(x2, params)
    assert out2.shape == (300, 1)
    assert jnp.allclose(out2, ref2, atol=1e-3, rtol=1e-3)

    # Explicit small tile: 3 grid steps over the batch.
    out3 = jax.block_until_ready(hazard_regression(x2, params, tile_b=128))
    assert out3.shape == (300, 1)
    assert jnp.allclose(out3, ref2, atol=1e-3, rtol=1e-3)

    print("KERNEL_OK")
</pallas_src>

<mosaic_0001>
module attributes {stable_mosaic.version = 11 : i64} {
  func.func @hazard_kernel(%arg0: i32, %arg1: memref<128x16xf32, #tpu.memory_space<vmem>>, %arg2: memref<32x16xbf16, #tpu.memory_space<vmem>>, %arg3: memref<32x1xf32, #tpu.memory_space<vmem>>, %arg4: memref<1x32xf32, #tpu.memory_space<vmem>>, %arg5: memref<1x1xf32, #tpu.memory_space<smem>>, %arg6: memref<1x1x128xf32, #tpu.memory_space<vmem>>) attributes {dimension_semantics = [#tpu.dimension_semantics<parallel>], iteration_bounds = array<i64: 1>, scalar_prefetch = 0 : i64, scratch_operands = 0 : i64, tpu.core_type = #tpu.core_type<tc>, window_params = [{transform_indices = @transform_0, window_bounds = array<i64: 128, 16>}, {pipeline_mode = #tpu.pipeline_mode<synchronous>, transform_indices = @transform_1, window_bounds = array<i64: 32, 16>}, {pipeline_mode = #tpu.pipeline_mode<synchronous>, transform_indices = @transform_2, window_bounds = array<i64: 32, 1>}, {pipeline_mode = #tpu.pipeline_mode<synchronous>, transform_indices = @transform_3, window_bounds = array<i64: 1, 32>}, {transform_indices = @transform_4, window_bounds = array<i64: 1, 1>}, {transform_indices = @transform_5, window_bounds = array<i64: 1, 1, 128>}]} {
    %c0 = arith.constant 0 : index
    %c0_0 = arith.constant 0 : index
    %0 = vector.load %arg1[%c0, %c0_0] : memref<128x16xf32, #tpu.memory_space<vmem>>, vector<128x16xf32>
    %1 = arith.truncf %0 : vector<128x16xf32> to vector<128x16xbf16>
    %c0_1 = arith.constant 0 : index
    %c0_2 = arith.constant 0 : index
    %2 = vector.load %arg2[%c0_1, %c0_2] : memref<32x16xbf16, #tpu.memory_space<vmem>>, vector<32x16xbf16>
    %cst = arith.constant dense<0.000000e+00> : vector<32x128xf32>
    %3 = tpu.matmul %2, %1, %cst {dimension_numbers = #tpu.dot_dimension_numbers<[1], [1], [0], [0], [0, 0, 1, 0], [], []>} : vector<32x16xbf16>, vector<128x16xbf16>, vector<32x128xf32> -> vector<32x128xf32>
    %c0_3 = arith.constant 0 : index
    %c0_4 = arith.constant 0 : index
    %4 = vector.load %arg3[%c0_3, %c0_4] : memref<32x1xf32, #tpu.memory_space<vmem>>, vector<32x1xf32>
    %5 = vector.broadcast %4 : vector<32x1xf32> to vector<32x128xf32>
    %6 = arith.addf %3, %5 : vector<32x128xf32>
    %cst_5 = arith.constant 0.000000e+00 : f32
    %7 = vector.broadcast %cst_5 : f32 to vector<32x128xf32>
    %8 = arith.maximumf %6, %7 : vector<32x128xf32>
    %c0_6 = arith.constant 0 : index
    %c0_7 = arith.constant 0 : index
    %9 = vector.load %arg4[%c0_6, %c0_7] : memref<1x32xf32, #tpu.memory_space<vmem>>, vector<1x32xf32>
    %cst_8 = arith.constant dense<0.000000e+00> : vector<1x128xf32>
    %10 = tpu.matmul %9, %8, %cst_8 {dimension_numbers = #tpu.dot_dimension_numbers<[1], [0], [0], [1], [0, 0, 1, 1], [], []>} : vector<1x32xf32>, vector<32x128xf32>, vector<1x128xf32> -> vector<1x128xf32>
    %c0_9 = arith.constant 0 : index
    %c0_10 = arith.constant 0 : index
    %11 = memref.load %arg5[%c0_9, %c0_10] : memref<1x1xf32, #tpu.memory_space<smem>>
    %12 = vector.broadcast %11 : f32 to vector<1x128xf32>
    %13 = arith.addf %10, %12 : vector<1x128xf32>
    %cst_11 = arith.constant -7.500000e+01 : f32
    %cst_12 = arith.constant 7.500000e+01 : f32
    %14 = vector.broadcast %cst_11 : f32 to vector<1x128xf32>
    %15 = arith.maximumf %14, %13 : vector<1x128xf32>
    %16 = vector.broadcast %cst_12 : f32 to vector<1x128xf32>
    %17 = arith.minimumf %16, %15 : vector<1x128xf32>
    %18 = vector.shape_cast %17 : vector<1x128xf32> to vector<1x1x128xf32>
    %c0_13 = arith.constant 0 : index
    %c0_14 = arith.constant 0 : index
    %c0_15 = arith.constant 0 : index
    %19 = vector.load %arg6[%c0_13, %c0_14, %c0_15] : memref<1x1x128xf32, #tpu.memory_space<vmem>>, vector<1x1x128xf32>
    tpu.vector_store %arg6[%c0_13, %c0_14, %c0_15], %18 {strides = array<i32>} : memref<1x1x128xf32, #tpu.memory_space<vmem>>, vector<1x1x128xf32>,
    return
  }
  func.func @transform_0(%arg0: i32) -> (i32, i32) {
    %c0_i32 = arith.constant 0 : i32
    %c0_i32_0 = arith.constant 0 : i32
    return %arg0, %c0_i32 : i32, i32
  }
  func.func @transform_1(%arg0: i32) -> (i32, i32) {
    %c0_i32 = arith.constant 0 : i32
    %c0_i32_0 = arith.constant 0 : i32
    %c0_i32_1 = arith.constant 0 : i32
    return %c0_i32, %c0_i32_0 : i32, i32
  }
  func.func @transform_2(%arg0: i32) -> (i32, i32) {
    %c0_i32 = arith.constant 0 : i32
    %c0_i32_0 = arith.constant 0 : i32
    %c0_i32_1 = arith.constant 0 : i32
    return %c0_i32, %c0_i32_0 : i32, i32
  }
  func.func @transform_3(%arg0: i32) -> (i32, i32) {
    %c0_i32 = arith.constant 0 : i32
    %c0_i32_0 = arith.constant 0 : i32
    %c0_i32_1 = arith.constant 0 : i32
    return %c0_i32, %c0_i32_0 : i32, i32
  }
  func.func @transform_4(%arg0: i32) -> (i32, i32) {
    %c0_i32 = arith.constant 0 : i32
    %c0_i32_0 = arith.constant 0 : i32
    %c0_i32_1 = arith.constant 0 : i32
    return %c0_i32, %c0_i32_0 : i32, i32
  }
  func.func @transform_5(%arg0: i32) -> (i32, i32, i32) {
    %c0_i32 = arith.constant 0 : i32
    %c0_i32_0 = arith.constant 0 : i32
    %c0_i32_1 = arith.constant 0 : i32
    return %arg0, %c0_i32, %c0_i32_0 : i32, i32, i32
  }
}

</mosaic_0001>

<llo_original>
// kernel: tpu_custom_call.1
$region0: #{tpu_custom_call.1}
  #allocation0 [shape = 'u32[]', space=smem, size = 0x4, offset = 0x4, fixed_abs, tag = 'smem constant byte address 0x4 - core index']
  #allocation1 [shape = 'u32[72,128]{1,0:T(1,128)}', space=vmem, size = 0x9000, scoped, tag = 'internal scratch']
  #allocation2 [shape = 'f32[1,1]{1,0:T(1,128)S(6)}', space=smem, size = 0x200, scoped, tag = 'scoped memory for tpu_custom_call.1']
  %s0 = inlined_call_operand.vmem [shape: f32[128,16], index: 0, kind: input, shape index: {}]
  %s1 = inlined_call_operand.vmem [shape: bf16[32,16], index: 1, kind: input, shape index: {}]
  %s2 = inlined_call_operand.vmem [shape: f32[32,1], index: 2, kind: input, shape index: {}]
  %s3 = inlined_call_operand.vmem [shape: f32[1,32], index: 3, kind: input, shape index: {}]
  %s4 = inlined_call_operand.<no memory space> [shape: f32[1,1], index: 4, kind: input, shape index: {}]
  %s5 = inlined_call_operand.hbm [shape: f32[1,1,128], index: 5, kind: output, shape index: {}]
  %s6 = sld [smem:[#allocation0]]
  $region30: #{tpu_custom_call.1} parent=0
    _
  %s8 = ssub.s32 1, %s6
  %s9 = scalar_select 0, %s8, %s6
  %10 = sst [smem:[#allocation2]] %s4
  $region1: #{tpu_custom_call.1} parent=0
    #allocation3 [shape = 'u8[512]{0}', space=vmem, size = 0x400, scoped, tag = 'output window, operand 0, single buffered']
    #allocation4 [shape = 's32[1]{0}', space=sflag, size = 0x4, scoped, tag = 'scoped memory for tpu_custom_call.1']
    %11 = vsyncpa [#allocation4], 0
    // Predicated region
    $region2: #{tpu_custom_call.1} parent=1 // pred_check
      _
    $region3: #{tpu_custom_call.1} parent=1 // pred_check_branch
      %13 = sbr.rel (0) target = $region5
    $region4: #{tpu_custom_call.1} parent=1 // pred_region
      _
    $region5: #{tpu_custom_call.1} parent=1 // pred_fallthru
      _
    // Predicated region
    $region6: #{tpu_custom_call.1} parent=1 // pred_check
      _
    $region7: #{tpu_custom_call.1} parent=1 // pred_check_branch
      %15 = sbr.rel (0) target = $region9
    $region8: #{tpu_custom_call.1} parent=1 // pred_region
      _
    $region9: #{tpu_custom_call.1} parent=1 // pred_fallthru
      _
    // Predicated region
    $region10: #{tpu_custom_call.1} parent=1 // pred_check
      _
    $region11: #{tpu_custom_call.1} parent=1 // pred_check_branch
      %17 = sbr.rel (0) target = $region13
    $region12: #{tpu_custom_call.1} parent=1 // pred_region
      _
    $region13: #{tpu_custom_call.1} parent=1 // pred_fallthru
      _
    // Predicated region
    $region14: #{tpu_custom_call.1} parent=1 // pred_check
      _
    $region15: #{tpu_custom_call.1} parent=1 // pred_check_branch
      %19 = sbr.rel (0) target = $region17
    $region16: #{tpu_custom_call.1} parent=1 // pred_region
      _
    $region17: #{tpu_custom_call.1} parent=1 // pred_fallthru
      _
    // Predicated region
    $region18: #{tpu_custom_call.1} parent=1 // pred_check
      _
    $region19: #{tpu_custom_call.1} parent=1 // pred_check_branch
      %21 = sbr.rel (0) target = $region21
    $region20: #{tpu_custom_call.1} parent=1 // pred_region
      _
    $region21: #{tpu_custom_call.1} parent=1 // pred_fallthru
      _
    %v22 = vld [vmem:[%s0] sm:$0xff]
    %v23 = vld [vmem:[%s0 + $0x8] sm:$0xff]
    %v24 = vld [vmem:[%s0 + $0x10] sm:$0xff]
    %v25 = vld [vmem:[%s0 + $0x18] sm:$0xff]
    %v26 = vld [vmem:[%s0 + $0x20] sm:$0xff]
    %v27 = vld [vmem:[%s0 + $0x28] sm:$0xff]
    %v28 = vld [vmem:[%s0 + $0x30] sm:$0xff]
    %v29 = vld [vmem:[%s0 + $0x38] sm:$0xff]
    %v30 = vld [vmem:[%s0 + $0x40] sm:$0xff]
    %v31 = vld [vmem:[%s0 + $0x48] sm:$0xff]
    %v32 = vld [vmem:[%s0 + $0x50] sm:$0xff]
    %v33 = vld [vmem:[%s0 + $0x58] sm:$0xff]
    %v34 = vld [vmem:[%s0 + $0x60] sm:$0xff]
    %v35 = vld [vmem:[%s0 + $0x68] sm:$0xff]
    %v36 = vld [vmem:[%s0 + $0x70] sm:$0xff]
    %v37 = vld [vmem:[%s0 + $0x78] sm:$0xff]
    %v38 = vpack.c.bf16 %v23, %v22
    %v39 = vpack.c.bf16 %v25, %v24
    %v40 = vpack.c.bf16 %v27, %v26
    %v41 = vpack.c.bf16 %v29, %v28
    %v42 = vpack.c.bf16 %v31, %v30
    %v43 = vpack.c.bf16 %v33, %v32
    %v44 = vpack.c.bf16 %v35, %v34
    %v45 = vpack.c.bf16 %v37, %v36
    %v46 = vld [vmem:[%s1] sm:$0xf]
    %v47 = vld [vmem:[%s1 + $0x4] sm:$0xf]
    %v48 = vld [vmem:[%s1 + $0x8] sm:$0xf]
    %v49 = vld [vmem:[%s1 + $0xc] sm:$0xf]
    %v50 = vld [vmem:[%s2] sm:$0xff]
    %v51 = vld [vmem:[%s2 + $0x8] sm:$0xff]
    %v52 = vld [vmem:[%s2 + $0x10] sm:$0xff]
    %v53 = vld [vmem:[%s2 + $0x18] sm:$0xff]
    %55 = vset.pattern.permute.xlu0 0
    %56 = vperm.xlu0 %55, %v50
    %v57 = vpop.permute.xlu0 %56
    %60 = vset.pattern.permute.xlu0 0
    %61 = vperm.xlu0 %60, %v51
    %v62 = vpop.permute.xlu0 %61
    %65 = vset.pattern.permute.xlu0 0
    %66 = vperm.xlu0 %65, %v52
    %v67 = vpop.permute.xlu0 %66
    %70 = vset.pattern.permute.xlu0 0
    %71 = vperm.xlu0 %70, %v53
    %v72 = vpop.permute.xlu0 %71
    %v78 = vunpack.c.l.b16 %v46
    %v79 = vunpack.c.l.b16 %v47
    %v80 = vunpack.c.l.b16 %v48
    %v81 = vunpack.c.l.b16 %v49
    %v82 = vpack.c.b16 %v79, %v78
    %v83 = vpack.c.b16 %v81, %v80
    %vm84 = vcmask 130048
    %v86 = vsel %vm84, %v82, 0
    %v89 = vsel %vm84, %v83, 0
    %v92 = vsel %vm84, %v38, 0
    %v95 = vsel %vm84, %v39, 0
    %v98 = vsel %vm84, %v40, 0
    %v101 = vsel %vm84, %v41, 0
    %v104 = vsel %vm84, %v42, 0
    %v107 = vsel %vm84, %v43, 0
    %v110 = vsel %vm84, %v44, 0
    %v113 = vsel %vm84, %v45, 0
    %115 = vmatpush.bf16.xpose.msra.mxu0 %v113
    %116 = vmatpush.bf16.xpose.msra.mxu0 %v110
    %117 = vmatpush.bf16.xpose.msra.mxu0 %v107
    %118 = vmatpush.bf16.xpose.msra.mxu0 %v104
    %119 = vmatpush.bf16.xpose.msra.mxu0 %v101
    %120 = vmatpush.bf16.xpose.msra.mxu0 %v98
    %121 = vmatpush.bf16.xpose.msra.mxu0 %v95
    %122 = vmatpush.bf16.xpose.msra.mxu0 %v92
    %123 = vmatmul.bf16.gmra.mxu0 %v86
    %v124 = vpop.f32.mrf.mxu0
    %v125 = vadd.f32 %v57, %v124
    %v126 = vpop.f32.mrf.mxu0
    %v127 = vadd.f32 %v62, %v126
    %128 = vmatmul.bf16.gmra.mxu0 %v89
    %v129 = vpop.f32.mrf.mxu0
    %v130 = vadd.f32 %v67, %v129
    %v131 = vpop.f32.mrf.mxu0
    %v132 = vadd.f32 %v72, %v131
    %133 = vdwg.mxu0
    %v134 = vmax.f32 %v125, 0.0
    %v135 = vmax.f32 %v127, 0.0
    %v136 = vmax.f32 %v130, 0.0
    %v137 = vmax.f32 %v132, 0.0
    %v138 = vld [vmem:[%s3] sm:$0x1]
    %s139 = sld [smem:[#allocation2]]
    %v140 = vstv %s139
    %vm141 = vcmask 261120
    %v143 = vsel %vm141, %v138, 0
    %145 = vmatpush.msra.mxu0 0.0
    %146 = vmatpush.msra.mxu0 0.0
    %147 = vmatpush.msra.mxu0 0.0
    %148 = vmatpush.msra.mxu0 0.0
    %149 = vmatpush.msra.mxu0 0.0
    %150 = vmatpush.msra.mxu0 0.0
    %151 = vmatpush.msra.mxu0 0.0
    %152 = vmatpush.msra.mxu0 0.0
    %153 = vmatpush.msra.mxu0 0.0
    %154 = vmatpush.msra.mxu0 0.0
    %155 = vmatpush.msra.mxu0 0.0
    %156 = vmatpush.msra.mxu0 0.0
    %157 = vmatpush.msra.mxu0 %v137
    %158 = vmatpush.msra.mxu0 %v136
    %159 = vmatpush.msra.mxu0 %v135
    %160 = vmatpush.msra.mxu0 %v134
    %161 = vmatmul.f32.gmra.mxu0 %v143
    %v162 = vpop.f32.mrf.mxu0
    %v163 = vadd.f32 %v140, %v162
    %164 = vdwg.mxu0
    %v165 = vmax.f32 %v163, -75.0
    %v166 = vmin.f32 %v165, 75.0
    %167 = vst [vmem:[#allocation3] sm:$0x1] %v166
    // Predicated region
    $region22: #{tpu_custom_call.1} parent=1 // pred_check
      _
    $region23: #{tpu_custom_call.1} parent=1 // pred_check_branch
      %169 = sbr.rel (0) target = $region25
    $region24: #{tpu_custom_call.1} parent=1 // pred_region
      %171 = vsyncadd [#allocation4], 0
      %s173 = sshll.u32 [#allocation3], 4
      %s174 = int_to_ptr.vmem [resolvable:$true] %s173
      %s175 = sshll.u32 %s5, 4
      %s176 = int_to_ptr.hbm [resolvable:$true] %s175
      %178 = dma.vmem_to_hbm [thread:$0]  %s174, 16, %s176, [#allocation4]
    $region25: #{tpu_custom_call.1} parent=1 // pred_fallthru
      _
    // Predicated region
    $region26: #{tpu_custom_call.1} parent=1 // pred_check
      _
    $region27: #{tpu_custom_call.1} parent=1 // pred_check_branch
      %180 = sbr.rel (0) target = $region29
    $region28: #{tpu_custom_call.1} parent=1 // pred_region
      %182 = dma.done [#allocation4], 16
    $region29: #{tpu_custom_call.1} parent=1 // pred_fallthru
      _
    %183 = vsyncpa [#allocation4], 1

</llo_original>
